<compile_context>
chip_gen: v6e
topology: v6e:2x2x1
jax: 0.10.0
libtpu: 0.0.40
codegen_flags: <defaults>
</compile_context>

<pallas_src>
import jax
import jax.numpy as jnp
from jax.experimental import pallas as pl
from jax.experimental.pallas import tpu as pltpu


def _round_up(a: int, b: int) -> int:
    return -(-a // b) * b


def _swish_kernel(x_ref, o_ref):
    x = x_ref[...]
    xf = x.astype(jnp.float32)          # explicit upcast (v5e: no bf16 VPU/EUP)
    e = jnp.exp(-xf)                    # EUP
    # Exact reciprocal keeps us bit-close to the f32 reference; the kernel is
    # HBM-bound so the divide is hidden. Use approx=True for free EUP rcp if
    # a few ulps of drift are acceptable.
    y = xf * pl.reciprocal(1.0 + e, approx=False)
    o_ref[...] = y.astype(o_ref.dtype)


def swish(x: jax.Array) -> jax.Array:
    """Elementwise swish; matches `x * x.sigmoid()` for any shape/dtype."""
    orig_shape = x.shape
    orig_dtype = x.dtype
    n = x.size
    if n == 0:
        return x

    item = jnp.dtype(orig_dtype).itemsize
    cols = 512  # lane-dense width: large multiple of 128

    rows_needed = pl.cdiv(n, cols)

    # ---- VMEM-aware tile sizing (bytes, not a fixed row count) -------------
    try:
        vmem_cap = int(pltpu.get_tpu_info().vmem_capacity_bytes)
    except Exception:
        vmem_cap = 64 * 1024 * 1024  # conservative: v7x per-TensorCore VMEM
    # in + out, double-buffered => ~4x the input block stays live; keep that
    # under ~1/4 of VMEM so the pipeline never loses its second buffer.
    max_tile_bytes = max(512 * 1024, (vmem_cap // 4) // 4)
    target_tile_bytes = min(4 * 1024 * 1024, max_tile_bytes)

    tile_rows = max(8, (target_tile_bytes // (cols * item)) // 8 * 8)

    if rows_needed <= tile_rows:
        # Small input: still try to expose >=2 blocks (v7x has 2 TCs) when
        # there is enough data to split; otherwise one minimal block.
        if rows_needed >= 16:
            tile_rows = _round_up(pl.cdiv(rows_needed, 2), 8)
        else:
            tile_rows = _round_up(rows_needed, 8)

    num_blocks = pl.cdiv(rows_needed, tile_rows)
    rows_padded = num_blocks * tile_rows
    padded_n = rows_padded * cols
    tile_bytes = tile_rows * cols * item

    # ---- Flatten to the lane-dense slab (pad tail; sliced off afterwards) --
    x_flat = x.reshape(-1)
    if padded_n != n:
        x_flat = jnp.pad(x_flat, (0, padded_n - n))
    x2 = x_flat.reshape(rows_padded, cols)

    vmem_limit = int(min(vmem_cap // 2, max(16 * 1024 * 1024, 6 * tile_bytes)))

    cost = pl.CostEstimate(
        flops=3 * padded_n,
        transcendentals=padded_n,
        bytes_accessed=2 * padded_n * item,
    )

    out2 = pl.pallas_call(
        _swish_kernel,
        out_shape=jax.ShapeDtypeStruct((rows_padded, cols), orig_dtype),
        grid_spec=pltpu.PrefetchScalarGridSpec(
            num_scalar_prefetch=0,
            grid=(num_blocks,),
            in_specs=[pl.BlockSpec((tile_rows, cols), lambda i: (i, 0))],
            out_specs=pl.BlockSpec((tile_rows, cols), lambda i: (i, 0)),
        ),
        compiler_params=pltpu.CompilerParams(
            dimension_semantics=("parallel",),
            vmem_limit_bytes=vmem_limit,
        ),
        cost_estimate=cost,
    )(x2)

    return out2.reshape(-1)[:n].reshape(orig_shape)


if __name__ == "__main__":
    key = jax.random.PRNGKey(0)

    # Small NCHW input consistent with how Swish is typically used in convnets.
    x = jax.random.normal(key, (2, 4, 16, 16), dtype=jnp.float32)
    y = swish(x)
    jax.block_until_ready(y)
    y_ref = x * jax.nn.sigmoid(x)
    assert y.shape == x.shape and y.dtype == x.dtype
    assert jnp.allclose(y, y_ref, atol=1e-5, rtol=1e-5)

    # Second small, non-divisible shape to exercise the padded multi-block path.
    x2 = jax.random.normal(jax.random.PRNGKey(1), (2, 8, 32, 33), dtype=jnp.float32)
    y2 = swish(x2)
    jax.block_until_ready(y2)
    y2_ref = x2 * jax.nn.sigmoid(x2)
    assert y2.shape == x2.shape and y2.dtype == x2.dtype
    assert jnp.allclose(y2, y2_ref, atol=1e-5, rtol=1e-5)

    print("KERNEL_OK")
</pallas_src>

<mosaic_0001>
module attributes {stable_mosaic.version = 11 : i64} {
  func.func @_swish_kernel(%arg0: i32, %arg1: memref<8x512xf32, #tpu.memory_space<vmem>>, %arg2: memref<8x512xf32, #tpu.memory_space<vmem>>) attributes {dimension_semantics = [#tpu.dimension_semantics<parallel>], iteration_bounds = array<i64: 1>, scalar_prefetch = 0 : i64, scratch_operands = 0 : i64, tpu.core_type = #tpu.core_type<tc>, window_params = [{transform_indices = @transform_0, window_bounds = array<i64: 8, 512>}, {transform_indices = @transform_1, window_bounds = array<i64: 8, 512>}]} {
    %c0 = arith.constant 0 : index
    %c0_0 = arith.constant 0 : index
    %0 = vector.load %arg1[%c0, %c0_0] : memref<8x512xf32, #tpu.memory_space<vmem>>, vector<8x512xf32>
    %cst = arith.constant 0.000000e+00 : f32
    %1 = vector.broadcast %cst : f32 to vector<8x512xf32>
    %2 = arith.subf %1, %0 : vector<8x512xf32>
    %3 = math.exp %2 : vector<8x512xf32>
    %cst_1 = arith.constant 1.000000e+00 : f32
    %4 = vector.broadcast %cst_1 : f32 to vector<8x512xf32>
    %5 = arith.addf %4, %3 : vector<8x512xf32>
    %6 = tpu.reciprocal %5 : vector<8x512xf32> -> vector<8x512xf32>
    %7 = arith.mulf %0, %6 : vector<8x512xf32>
    %c0_2 = arith.constant 0 : index
    %c0_3 = arith.constant 0 : index
    %8 = vector.load %arg2[%c0_2, %c0_3] : memref<8x512xf32, #tpu.memory_space<vmem>>, vector<8x512xf32>
    tpu.vector_store %arg2[%c0_2, %c0_3], %7 {strides = array<i32>} : memref<8x512xf32, #tpu.memory_space<vmem>>, vector<8x512xf32>,
    return
  }
  func.func @transform_0(%arg0: i32) -> (i32, i32) {
    %c0_i32 = arith.constant 0 : i32
    %c0_i32_0 = arith.constant 0 : i32
    return %arg0, %c0_i32 : i32, i32
  }
  func.func @transform_1(%arg0: i32) -> (i32, i32) {
    %c0_i32 = arith.constant 0 : i32
    %c0_i32_0 = arith.constant 0 : i32
    return %arg0, %c0_i32 : i32, i32
  }
}

</mosaic_0001>

<llo_original>
// kernel: tpu_custom_call.1
$region0: #{tpu_custom_call.1}
  #allocation0 [shape = 'u32[]', space=smem, size = 0x4, offset = 0x4, fixed_abs, tag = 'smem constant byte address 0x4 - core index']
  #allocation1 [shape = 'u32[144,128]{1,0:T(1,128)}', space=vmem, size = 0x12000, scoped, tag = 'internal scratch']
  %s0 = inlined_call_operand.hbm [shape: f32[8,512], index: 0, kind: input, shape index: {}]
  %s1 = inlined_call_operand.hbm [shape: f32[8,512], index: 1, kind: output, shape index: {}]
  %s2 = sld [smem:[#allocation0]]
  $region18: #{tpu_custom_call.1} parent=0
    _
  %s4 = ssub.s32 1, %s2
  %s5 = scalar_select 0, %s4, %s2
  $region1: #{tpu_custom_call.1} parent=0
    #allocation2 [shape = 'u8[16384]{0}', space=vmem, size = 0x4000, scoped, tag = 'input window, operand 0, single buffered']
    #allocation3 [shape = 's32[1]{0}', space=sflag, size = 0x4, scoped, tag = 'scoped memory for tpu_custom_call.1']
    #allocation4 [shape = 's32[1]{0}', space=sflag, size = 0x4, scoped, tag = 'scoped memory for tpu_custom_call.1']
    #allocation5 [shape = 'u8[16384]{0}', space=vmem, size = 0x4000, scoped, tag = 'output window, operand 0, single buffered']
    %6 = vsyncpa [#allocation3], 0
    %7 = vsyncpa [#allocation4], 0
    // Predicated region
    $region2: #{tpu_custom_call.1} parent=1 // pred_check
      _
    $region3: #{tpu_custom_call.1} parent=1 // pred_check_branch
      %9 = sbr.rel (0) target = $region5
    $region4: #{tpu_custom_call.1} parent=1 // pred_region
      %s11 = ssub.s32 512, 512
      %12 = vsyncadd [#allocation3], %s11
      %s14 = sshll.u32 [#allocation2], 4
      %s15 = int_to_ptr.vmem [resolvable:$true] %s14
      %17 = dma.hbm_to_vmem [thread:$0]  %s0, 512, %s15, [#allocation3]
    $region5: #{tpu_custom_call.1} parent=1 // pred_fallthru
      _
    // Predicated region
    $region6: #{tpu_custom_call.1} parent=1 // pred_check
      _
    $region7: #{tpu_custom_call.1} parent=1 // pred_check_branch
      %19 = sbr.rel (0) target = $region9
    $region8: #{tpu_custom_call.1} parent=1 // pred_region
      %20 = dma.done [#allocation3], 512
    $region9: #{tpu_custom_call.1} parent=1 // pred_fallthru
      _
    %v21 = vld [vmem:[#allocation2] sm:$0xff]
    %v22 = vld [vmem:[#allocation2 + $0x8] sm:$0xff]
    %v23 = vld [vmem:[#allocation2 + $0x10] sm:$0xff]
    %v24 = vld [vmem:[#allocation2 + $0x18] sm:$0xff]
    %v25 = vsub.f32 0.0, %v21
    %v26 = vsub.f32 0.0, %v22
    %v27 = vsub.f32 0.0, %v23
    %v28 = vsub.f32 0.0, %v24
    %v29 = vmul.f32 %v25, 1.442695
    %v30 = vpow.pop %v29
    %v31 = vmul.f32 %v26, 1.442695
    %v32 = vpow.pop %v31
    %v33 = vmul.f32 %v27, 1.442695
    %v34 = vpow.pop %v33
    %v35 = vmul.f32 %v28, 1.442695
    %v36 = vpow.pop %v35
    %v37 = vadd.f32 %v30, 1.0
    %v38 = vadd.f32 %v32, 1.0
    %v39 = vadd.f32 %v34, 1.0
    %v40 = vadd.f32 %v36, 1.0
    %v41 = vrcp.pop %v37
    %v42 = vrcp.pop %v38
    %v43 = vrcp.pop %v39
    %v44 = vrcp.pop %v40
    %v45 = vmul.f32 %v21, %v41
    %v46 = vmul.f32 %v22, %v42
    %v47 = vmul.f32 %v23, %v43
    %v48 = vmul.f32 %v24, %v44
    %49 = vst [vmem:[#allocation5] sm:$0xff] %v45
    %50 = vst [vmem:[#allocation5 + $0x8] sm:$0xff] %v46
    %51 = vst [vmem:[#allocation5 + $0x10] sm:$0xff] %v47
    %52 = vst [vmem:[#allocation5 + $0x18] sm:$0xff] %v48
    // Predicated region
    $region10: #{tpu_custom_call.1} parent=1 // pred_check
      _
    $region11: #{tpu_custom_call.1} parent=1 // pred_check_branch
      %54 = sbr.rel (0) target = $region13
    $region12: #{tpu_custom_call.1} parent=1 // pred_region
      %s56 = ssub.s32 512, 512
      %57 = vsyncadd [#allocation4], %s56
      %s59 = sshll.u32 [#allocation5], 4
      %s60 = int_to_ptr.vmem [resolvable:$true] %s59
      %62 = dma.vmem_to_hbm [thread:$0]  %s60, 512, %s1, [#allocation4]
    $region13: #{tpu_custom_call.1} parent=1 // pred_fallthru
      _
    // Predicated region
    $region14: #{tpu_custom_call.1} parent=1 // pred_check
      _
    $region15: #{tpu_custom_call.1} parent=1 // pred_check_branch
      %64 = sbr.rel (0) target = $region17
    $region16: #{tpu_custom_call.1} parent=1 // pred_region
      %65 = dma.done [#allocation4], 512
    $region17: #{tpu_custom_call.1} parent=1 // pred_fallthru
      _
    %66 = vsyncpa [#allocation3], 1
    %67 = vsyncpa [#allocation4], 1

</llo_original>
